<compile_context>
chip_gen: v5e
topology: v5e:2x2
jax: 0.10.0
libtpu: 0.0.40
codegen_flags: <defaults>
</compile_context>

<pallas_src>
import jax
import jax.numpy as jnp
from jax.experimental import pallas as pl
from jax.experimental.pallas import tpu as pltpu


_VMEM_BUDGET = 32 * 1024 * 1024   # conservative working budget across v5e/v6e/v7x


def make_adj_kernel(T: float):
    """Kernel body with the (static) temperature T baked in."""

    def adj_kernel(sem_ref, fc_ref, adj_ref, out_ref):
        # Numerically-stable *unnormalized* softmax numerator for this (TM, N)
        # tile.  Elementwise math stays f32 (v5e VPU/EUP have no bf16).
        logits = adj_ref[...].astype(jnp.float32) * jnp.float32(-T)
        row_max = jnp.max(logits, axis=1, keepdims=True)
        exps = jnp.exp(logits - row_max)                        # (TM, N) f32
        denom = jnp.sum(exps, axis=1, keepdims=True)            # (TM, 1) f32
        # TODO(synk): if profiling shows EUP saturation on v6e/v7x (small D),
        # compute the exp in bf16 and keep the denominator sum in f32.

        # MXU matmul in the resident operand's dtype (bf16 by default), f32
        # accumulate.  sem_ref already has the right dtype (cast once in the
        # wrapper), so no per-grid-step re-cast of the (N, D) block.
        sem = sem_ref[...]                                      # (N, D)
        x = jnp.dot(exps.astype(sem.dtype), sem,
                    preferred_element_type=jnp.float32)         # (TM, D) f32

        # Normalize AFTER the matmul: (TM, D) scale instead of (TM, N), and no
        # adj_norm temporary.  pl.reciprocal(approx=True) -> EUP slot.
        x = x * pl.reciprocal(denom, approx=True)

        # softmax rows sum to 1  =>  adj_norm @ (sem - fc) == adj_norm@sem - fc
        x = x - fc_ref[...]                                     # broadcast (1, D)

        # leaky_relu(x, 0.01)
        out_ref[...] = jnp.where(x >= 0, x, 0.01 * x).astype(out_ref.dtype)

    return adj_kernel


def _resident_spec(block_shape):
    """BlockSpec for an operand whose block index never changes.

    Single-buffer it (pl.Buffered(1)); double-buffering a resident block only
    doubles its VMEM footprint.  Falls back on JAX versions whose BlockSpec
    has no pipeline_mode support.
    """
    index_map = lambda i: (0, 0)
    try:
        return pl.BlockSpec(block_shape, index_map, pipeline_mode=pl.Buffered(1))
    except (AttributeError, TypeError):
        return pl.BlockSpec(block_shape, index_map)


def _pick_tile_m(M, N, D, adj_bytes, sem_bytes):
    """VMEM-aware M-tile: multiple of 8, capped so the grid has >= 2 steps."""
    m8 = ((max(M, 1) + 7) // 8) * 8
    # Resident blocks (single-buffered): semantic_vec (N, D) + tiny fc tile.
    resident = N * D * sem_bytes + 8 * max(D, 128) * 4
    avail = max(_VMEM_BUDGET - resident, 2 * 1024 * 1024)
    # Per output-row cost: double-buffered adj row + double-buffered out row
    # + ~2 f32 (N,) temporaries (logits / exps) inside the kernel.
    per_row = 2 * N * adj_bytes + 2 * D * 4 + 2 * N * 4
    cap = max(8, (avail // per_row) // 8 * 8)
    if m8 >= 16:
        # Keep >= 2 grid steps on the "parallel" M axis so the v7x megacore
        # can shard it across both TensorCores (no-op on v5e/v6e).
        cap = min(cap, max(8, (m8 // 2) // 8 * 8))
    return int(min(512, cap, m8))


def adj_module_forward(semantic_vec, field_center, adj, T,
                       use_bf16_matmul: bool = True,
                       adj_transport_dtype=None):
    """Pallas implementation of ADJModule.forward.

    semantic_vec: (N, D)
    field_center: (D,)   module buffer
    adj:          (M, N)
    returns:      (M, D) float32

    use_bf16_matmul:     bf16 MXU operands with f32 accumulation (default).
                         Set False for strict f32 parity with PyTorch.
    adj_transport_dtype: optionally stream adj in a narrower dtype (e.g.
                         jnp.bfloat16) to halve HBM traffic on v5e where the
                         kernel is bandwidth-bound on adj.  Softmax math is
                         still done in f32 in-kernel.
    """
    N, D = semantic_vec.shape
    M, N2 = adj.shape
    assert N == N2, (semantic_vec.shape, adj.shape)

    # One-time wrapper-side casts (avoid per-grid-step re-casting of the
    # resident (N, D) operand inside the kernel; halves its DMA when bf16).
    sem_dtype = jnp.bfloat16 if use_bf16_matmul else jnp.float32
    sem_in = semantic_vec.astype(sem_dtype)
    fc2d = field_center.astype(jnp.float32).reshape(1, D)
    adj_in = adj if adj_transport_dtype is None else adj.astype(adj_transport_dtype)

    sem_bytes = jnp.dtype(sem_in.dtype).itemsize
    adj_bytes = jnp.dtype(adj_in.dtype).itemsize

    tm = _pick_tile_m(M, N, D, adj_bytes, sem_bytes)
    grid_m = int(pl.cdiv(M, tm))
    M_pad = grid_m * tm
    if M_pad != M:
        # Pad the streamed operand so every (tm, N) block is full; padded rows
        # produce finite values that are sliced away below.
        adj_in = jnp.pad(adj_in, ((0, M_pad - M), (0, 0)))

    # Rough VMEM need -> explicit scoped-VMEM limit (avoids the 16/32 MiB
    # default ceilings and silent spills); clamp to the v7x physical 64 MiB.
    est_vmem = (N * D * sem_bytes + 8 * max(D, 128) * 4
                + 2 * tm * N * adj_bytes + 2 * tm * D * 4
                + 4 * tm * N * 4)
    vmem_limit = int(min(64 * 1024 * 1024, max(16 * 1024 * 1024, 2 * est_vmem)))

    cost = pl.CostEstimate(
        flops=2 * M_pad * N * D + 6 * M_pad * N + 3 * M_pad * D,
        transcendentals=M_pad * N,
        bytes_accessed=(adj_bytes * M_pad * N + sem_bytes * N * D
                        + 4 * D + 4 * M_pad * D),
    )

    # TODO(synk): if downstream tolerates it, emit bf16 output and/or fold a
    # D < 128 output into a lane-dense (multiple-of-128) last dim to avoid
    # masked partial stores.

    out = pl.pallas_call(
        make_adj_kernel(float(T)),
        out_shape=jax.ShapeDtypeStruct((M_pad, D), jnp.float32),
        grid_spec=pltpu.PrefetchScalarGridSpec(
            num_scalar_prefetch=0,
            grid=(grid_m,),
            in_specs=[
                _resident_spec((N, D)),                    # semantic_vec (resident)
                _resident_spec((1, D)),                    # field_center (resident)
                pl.BlockSpec((tm, N), lambda i: (i, 0)),   # adj (streamed over M)
            ],
            out_specs=pl.BlockSpec((tm, D), lambda i: (i, 0)),
        ),
        compiler_params=pltpu.CompilerParams(
            dimension_semantics=("parallel",),
            vmem_limit_bytes=vmem_limit),
        cost_estimate=cost,
    )(sem_in, fc2d, adj_in)

    return out[:M] if M_pad != M else out


def adj_module_reference(semantic_vec, field_center, adj, T):
    """Pure-JAX reference for correctness checking."""
    offsets = (semantic_vec.astype(jnp.float32)
               - field_center[None, :].astype(jnp.float32))
    adj_norm = jax.nn.softmax(adj.astype(jnp.float32) * -T, axis=1)
    x = adj_norm @ offsets
    return jnp.where(x >= 0, x, 0.01 * x)


if __name__ == "__main__":
    T = 0.5

    def check(name, sem, fc, adj, atol, rtol, **kw):
        out = jax.block_until_ready(adj_module_forward(sem, fc, adj, T, **kw))
        ref = adj_module_reference(sem, fc, adj, T)
        assert out.shape == ref.shape, (name, out.shape, ref.shape)
        err = float(jnp.max(jnp.abs(out - ref)))
        assert jnp.allclose(out, ref, atol=atol, rtol=rtol), (
            f"{name}: max abs err {err} exceeds atol={atol} rtol={rtol}")

    key = jax.random.PRNGKey(0)

    # Case 1: lane-dense, multi-tile grid (grid=(2,)), default bf16 MXU path.
    N, D, M = 128, 128, 256
    k1, k2, k3 = jax.random.split(key, 3)
    sem1 = jax.random.normal(k1, (N, D), dtype=jnp.float32)
    adj1 = jax.random.normal(k2, (M, N), dtype=jnp.float32)
    fc1 = jax.random.normal(k3, (D,), dtype=jnp.float32)
    check("case1_bf16", sem1, fc1, adj1, atol=2e-2, rtol=2e-2)

    # Case 1b: same shapes, strict f32 MXU path (tight tolerance).
    check("case1_f32", sem1, fc1, adj1, atol=2e-3, rtol=2e-3,
          use_bf16_matmul=False)

    # Case 2: tiny shape from the original module usage (full-array block).
    k4, k5, k6 = jax.random.split(jax.random.PRNGKey(1), 3)
    sem2 = jax.random.normal(k4, (8, 32), dtype=jnp.float32)
    adj2 = jax.random.normal(k5, (8, 8), dtype=jnp.float32)
    fc2 = jax.random.normal(k6, (32,), dtype=jnp.float32)
    check("case2_f32", sem2, fc2, adj2, atol=2e-3, rtol=2e-3,
          use_bf16_matmul=False)

    # Case 3: ragged M (exercises the padding + output-slice path).
    k7, k8, k9 = jax.random.split(jax.random.PRNGKey(2), 3)
    sem3 = jax.random.normal(k7, (128, 128), dtype=jnp.float32)
    adj3 = jax.random.normal(k8, (200, 128), dtype=jnp.float32)
    fc3 = jax.random.normal(k9, (128,), dtype=jnp.float32)
    check("case3_ragged_f32", sem3, fc3, adj3, atol=2e-3, rtol=2e-3,
          use_bf16_matmul=False)

    print("KERNEL_OK")
</pallas_src>

<mosaic_0001>
module attributes {stable_mosaic.version = 11 : i64} {
  func.func @adj_kernel(%arg0: i32, %arg1: memref<128x128xbf16, #tpu.memory_space<vmem>>, %arg2: memref<1x128xf32, #tpu.memory_space<vmem>>, %arg3: memref<128x128xf32, #tpu.memory_space<vmem>>, %arg4: memref<128x128xf32, #tpu.memory_space<vmem>>) attributes {dimension_semantics = [#tpu.dimension_semantics<parallel>], iteration_bounds = array<i64: 2>, scalar_prefetch = 0 : i64, scratch_operands = 0 : i64, tpu.core_type = #tpu.core_type<tc>, window_params = [{pipeline_mode = #tpu.pipeline_mode<synchronous>, transform_indices = @transform_0, window_bounds = array<i64: 128, 128>}, {pipeline_mode = #tpu.pipeline_mode<synchronous>, transform_indices = @transform_1, window_bounds = array<i64: 1, 128>}, {transform_indices = @transform_2, window_bounds = array<i64: 128, 128>}, {transform_indices = @transform_3, window_bounds = array<i64: 128, 128>}]} {
    %c0 = arith.constant 0 : index
    %c0_0 = arith.constant 0 : index
    %0 = vector.load %arg3[%c0, %c0_0] : memref<128x128xf32, #tpu.memory_space<vmem>>, vector<128x128xf32>
    %cst = arith.constant -5.000000e-01 : f32
    %1 = vector.broadcast %cst : f32 to vector<128x128xf32>
    %2 = arith.mulf %0, %1 : vector<128x128xf32>
    %cst_1 = arith.constant dense<0xFF800000> : vector<128xf32>
    %3 = vector.multi_reduction <maximumf>, %2, %cst_1 [1] : vector<128x128xf32> to vector<128xf32>
    %4 = vector.shape_cast %3 : vector<128xf32> to vector<128x1xf32>
    %5 = vector.broadcast %4 : vector<128x1xf32> to vector<128x128xf32>
    %6 = arith.subf %2, %5 : vector<128x128xf32>
    %7 = math.exp %6 : vector<128x128xf32>
    %cst_2 = arith.constant dense<0.000000e+00> : vector<128xf32>
    %8 = vector.multi_reduction <add>, %7, %cst_2 [1] : vector<128x128xf32> to vector<128xf32>
    %9 = vector.shape_cast %8 : vector<128xf32> to vector<128x1xf32>
    %c0_3 = arith.constant 0 : index
    %c0_4 = arith.constant 0 : index
    %10 = vector.load %arg1[%c0_3, %c0_4] : memref<128x128xbf16, #tpu.memory_space<vmem>>, vector<128x128xbf16>
    %11 = arith.truncf %7 : vector<128x128xf32> to vector<128x128xbf16>
    %cst_5 = arith.constant dense<0.000000e+00> : vector<128x128xf32>
    %12 = tpu.matmul %11, %10, %cst_5 {dimension_numbers = #tpu.dot_dimension_numbers<[1], [0], [0], [1], [0, 0, 1, 1], [], []>} : vector<128x128xbf16>, vector<128x128xbf16>, vector<128x128xf32> -> vector<128x128xf32>
    %13 = tpu.reciprocal %9 {approx = true} : vector<128x1xf32> -> vector<128x1xf32>
    %14 = vector.broadcast %13 : vector<128x1xf32> to vector<128x128xf32>
    %15 = arith.mulf %12, %14 : vector<128x128xf32>
    %c0_6 = arith.constant 0 : index
    %c0_7 = arith.constant 0 : index
    %16 = vector.load %arg2[%c0_6, %c0_7] : memref<1x128xf32, #tpu.memory_space<vmem>>, vector<1x128xf32>
    %17 = vector.broadcast %16 : vector<1x128xf32> to vector<128x128xf32>
    %18 = arith.subf %15, %17 : vector<128x128xf32>
    %cst_8 = arith.constant 0.000000e+00 : f32
    %19 = vector.broadcast %cst_8 : f32 to vector<128x128xf32>
    %20 = arith.cmpf oge, %18, %19 : vector<128x128xf32>
    %cst_9 = arith.constant 0.00999999977 : f32
    %21 = vector.broadcast %cst_9 : f32 to vector<128x128xf32>
    %22 = arith.mulf %21, %18 : vector<128x128xf32>
    %23 = arith.select %20, %18, %22 : vector<128x128xi1>, vector<128x128xf32>
    %c0_10 = arith.constant 0 : index
    %c0_11 = arith.constant 0 : index
    %24 = vector.load %arg4[%c0_10, %c0_11] : memref<128x128xf32, #tpu.memory_space<vmem>>, vector<128x128xf32>
    tpu.vector_store %arg4[%c0_10, %c0_11], %23 {strides = array<i32>} : memref<128x128xf32, #tpu.memory_space<vmem>>, vector<128x128xf32>,
    return
  }
  func.func @transform_0(%arg0: i32) -> (i32, i32) {
    %c0_i32 = arith.constant 0 : i32
    %c0_i32_0 = arith.constant 0 : i32
    %c0_i32_1 = arith.constant 0 : i32
    return %c0_i32, %c0_i32_0 : i32, i32
  }
  func.func @transform_1(%arg0: i32) -> (i32, i32) {
    %c0_i32 = arith.constant 0 : i32
    %c0_i32_0 = arith.constant 0 : i32
    %c0_i32_1 = arith.constant 0 : i32
    return %c0_i32, %c0_i32_0 : i32, i32
  }
  func.func @transform_2(%arg0: i32) -> (i32, i32) {
    %c0_i32 = arith.constant 0 : i32
    %c0_i32_0 = arith.constant 0 : i32
    return %arg0, %c0_i32 : i32, i32
  }
  func.func @transform_3(%arg0: i32) -> (i32, i32) {
    %c0_i32 = arith.constant 0 : i32
    %c0_i32_0 = arith.constant 0 : i32
    return %arg0, %c0_i32 : i32, i32
  }
}

</mosaic_0001>

<llo_original>
// kernel: tpu_custom_call.1
$region0: #{tpu_custom_call.1}
  #allocation0 [shape = 'u32[]', space=smem, size = 0x4, offset = 0x4, fixed_abs, tag = 'smem constant byte address 0x4 - core index']
  #allocation1 [shape = 'u32[72,128]{1,0:T(1,128)}', space=vmem, size = 0x9000, scoped, tag = 'internal scratch']
  %s0 = inlined_call_operand.hbm [shape: bf16[128,128], index: 0, kind: input, shape index: {}]
  %s1 = inlined_call_operand.hbm [shape: f32[1,128], index: 1, kind: input, shape index: {}]
  %s2 = inlined_call_operand.hbm [shape: f32[256,128], index: 2, kind: input, shape index: {}]
  %s3 = inlined_call_operand.hbm [shape: f32[256,128], index: 3, kind: output, shape index: {}]
  %s4 = sld [smem:[#allocation0]]
  $region57: #{tpu_custom_call.1} parent=0
    _
  %s6 = ssub.s32 1, %s4
  %s7 = scalar_select 0, %s6, %s4
  $region1: #{tpu_custom_call.1} parent=0
    #allocation2 [shape = 'u8[32768]{0}', space=vmem, size = 0x8000, scoped, tag = 'input window, operand 0, single buffered']
    #allocation3 [shape = 's32[2]{0}', space=sflag, size = 0x8, scoped, tag = 'scoped memory for tpu_custom_call.1']
    #allocation4 [shape = 's32[2]{0}', space=sflag, size = 0x8, scoped, tag = 'scoped memory for tpu_custom_call.1']
    #allocation5 [shape = 'u8[512]{0}', space=vmem, size = 0x400, scoped, tag = 'input window, operand 1, single buffered']
    #allocation6 [shape = 's32[1]{0}', space=sflag, size = 0x4, scoped, tag = 'scoped memory for tpu_custom_call.1']
    #allocation7 [shape = 'u8[131072]{0}', space=vmem, size = 0x20000, scoped, tag = 'input window, operand 2']
    #allocation8 [shape = 'u8[131072]{0}', space=vmem, size = 0x20000, scoped, tag = 'output window, operand 0']
    %8 = vsyncpa [#allocation3], 0
    %9 = vsyncpa [#allocation6], 0
    %10 = vsyncpa [#allocation4], 0
    %s11 = scalar_lea.sflag [#allocation4], 1
    %12 = vsyncpa %s11, 0
    loop: start=0, step=1, limit=4
    $region2: #{tpu_custom_call.1} parent=1 // loop_pre_header
      _
    $region3: #{tpu_custom_call.1} parent=1 // loop_header
      %s14 = sphi 0, %s18
      %p15 = scmp.ge.s32.totalorder %s14, 4
      %s22 = sphi 0, %s22
      %s24 = sphi 0, %s22
      %s25 = sphi 0, %s24
      %s39 = sphi 0, %s25
      %s43 = sphi 0, %s43
      %s45 = sphi 0, %s43
      %s46 = sphi 0, %s45
      %s60 = sphi 0, %s46
      %s66 = sphi 0, %s68
      %s69 = sphi 0, %s66
      %s70 = sphi 0, %s69
      %s86 = sphi 0, %s70
      %s92 = sphi 0, %s94
      %s95 = sphi 0, %s92
      %s96 = sphi 0, %s95
      %s112 = sphi 0, %s96
    $region4: #{tpu_custom_call.1} parent=1 // loop_header_branch
      %17 = sbr.rel (%p15) target = $region8
    $region5: #{tpu_custom_call.1} parent=1 // loop_body
      %s19 = ssub.s32 %s14, 1
      %s20 = ssub.s32 %s14, 2
      %s21 = sadd.s32 %s14, 1
      %s23 = sadd.s32 %s22, 1
      %p26 = scmp.eq.s32.totalorder %s14, 1
      %p27 = scmp.ne.s32.totalorder %s22, %s24
      %p28 = scmp.eq.s32.totalorder %s14, 0
      %p29 = por %p27, %p28
      %p30 = scmp.ne.s32.totalorder %s22, %s24
      %p31 = scmp.eq.s32.totalorder %s19, 1
      %p32 = por %p30, %p31
      %p33 = scmp.ne.s32.totalorder %s24, %s25
      %p34 = scmp.eq.s32.totalorder %s19, 0
      %p35 = por %p33, %p34
      %p36 = scmp.ne.s32.totalorder %s24, %s25
      %p37 = scmp.eq.s32.totalorder %s20, 1
      %p38 = por %p36, %p37
      %p40 = scmp.ne.s32.totalorder %s25, %s39
      %p41 = scmp.eq.s32.totalorder %s20, 0
      %p42 = por %p40, %p41
      %s44 = sadd.s32 %s43, 1
      %p47 = scmp.eq.s32.totalorder %s14, 1
      %p48 = scmp.ne.s32.totalorder %s43, %s45
      %p49 = scmp.eq.s32.totalorder %s14, 0
      %p50 = por %p48, %p49
      %p51 = scmp.ne.s32.totalorder %s43, %s45
      %p52 = scmp.eq.s32.totalorder %s19, 1
      %p53 = por %p51, %p52
      %p54 = scmp.ne.s32.totalorder %s45, %s46
      %p55 = scmp.eq.s32.totalorder %s19, 0
      %p56 = por %p54, %p55
      %p57 = scmp.ne.s32.totalorder %s45, %s46
      %p58 = scmp.eq.s32.totalorder %s20, 1
      %p59 = por %p57, %p58
      %p61 = scmp.ne.s32.totalorder %s46, %s60
      %p62 = scmp.eq.s32.totalorder %s20, 0
      %p63 = por %p61, %p62
      %s64 = ssub.s32 %s14, %s21
      %p65 = scmp.eq.s32.totalorder %s64, 0
      %s67 = sadd.s32 %s66, 1
      %s68 = scalar_select %p65, %s66, %s67
      %p71 = pneg %p65
      %p72 = scmp.eq.s32.totalorder %s14, 1
      %p73 = por %p71, %p72
      %p74 = scmp.ne.s32.totalorder %s66, %s69
      %p75 = scmp.eq.s32.totalorder %s14, 0
      %p76 = por %p74, %p75
      %p77 = scmp.ne.s32.totalorder %s66, %s69
      %p78 = scmp.eq.s32.totalorder %s19, 1
      %p79 = por %p77, %p78
      %p80 = scmp.ne.s32.totalorder %s69, %s70
      %p81 = scmp.eq.s32.totalorder %s19, 0
      %p82 = por %p80, %p81
      %p83 = scmp.ne.s32.totalorder %s69, %s70
      %p84 = scmp.eq.s32.totalorder %s20, 1
      %p85 = por %p83, %p84
      %p87 = scmp.ne.s32.totalorder %s70, %s86
      %p88 = scmp.eq.s32.totalorder %s20, 0
      %p89 = por %p87, %p88
      %s90 = ssub.s32 %s14, %s21
      %p91 = scmp.eq.s32.totalorder %s90, 0
      %s93 = sadd.s32 %s92, 1
      %s94 = scalar_select %p91, %s92, %s93
      %p97 = pneg %p91
      %p98 = scmp.eq.s32.totalorder %s14, 1
      %p99 = por %p97, %p98
      %p100 = scmp.ne.s32.totalorder %s92, %s95
      %p101 = scmp.eq.s32.totalorder %s14, 0
      %p102 = por %p100, %p101
      %p103 = scmp.ne.s32.totalorder %s92, %s95
      %p104 = scmp.eq.s32.totalorder %s19, 1
      %p105 = por %p103, %p104
      %p106 = scmp.ne.s32.totalorder %s95, %s96
      %p107 = scmp.eq.s32.totalorder %s19, 0
      %p108 = por %p106, %p107
      %p109 = scmp.ne.s32.totalorder %s95, %s96
      %p110 = scmp.eq.s32.totalorder %s20, 1
      %p111 = por %p109, %p110
      %p113 = scmp.ne.s32.totalorder %s96, %s112
      %p114 = scmp.eq.s32.totalorder %s20, 0
      %p115 = por %p113, %p114
      %p116 = scmp.le.s32.totalorder 1, %s14
      %p117 = scmp.lt.s32.totalorder %s14, 3
      %p118 = pnand %p116, %p117
      %p119 = pneg %p118
      // Predicated region
      $region9: #{tpu_custom_call.1} parent=5 // pred_check
        _
      $region10: #{tpu_custom_call.1} parent=5 // pred_check_branch
        %121 = sbr.rel (%p118) target = $region12
      $region11: #{tpu_custom_call.1} parent=5 // pred_region
        %s122 = ssub.s32 %s14, 1
        // Predicated region
        $region13: #{tpu_custom_call.1} parent=11 // pred_check
          %p123 = pneg %p35
        $region14: #{tpu_custom_call.1} parent=11 // pred_check_branch
          %125 = sbr.rel (%p123) target = $region16
        $region15: #{tpu_custom_call.1} parent=11 // pred_region
          %127 = vsyncadd [#allocation3], 0
          %s128 = sshll.u32 %s0, 4
          %s129 = int_to_ptr.hbm [resolvable:$true] %s128
          %s130 = sshll.u32 [#allocation2], 4
          %s131 = int_to_ptr.vmem [resolvable:$true] %s130
          %136 = dma.hbm_to_vmem [thread:$0]  %s129, 1024, %s131, [#allocation3], 64, 64, 4
        $region16: #{tpu_custom_call.1} parent=11 // pred_fallthru
          _
        // Predicated region
        $region17: #{tpu_custom_call.1} parent=11 // pred_check
          %p137 = pneg %p56
        $region18: #{tpu_custom_call.1} parent=11 // pred_check_branch
          %139 = sbr.rel (%p137) target = $region20
        $region19: #{tpu_custom_call.1} parent=11 // pred_region
          %141 = vsyncadd [#allocation6], 0
          %s143 = sshll.u32 %s1, 4
          %s144 = int_to_ptr.hbm [resolvable:$true] %s143
          %s145 = sshll.u32 [#allocation5], 4
          %s146 = int_to_ptr.vmem [resolvable:$true] %s145
          %148 = dma.hbm_to_vmem [thread:$0]  %s144, 16, %s146, [#allocation6]
        $region20: #{tpu_custom_call.1} parent=11 // pred_fallthru
          _
      $region12: #{tpu_custom_call.1} parent=5 // pred_fallthru
        _
      %p149 = scmp.lt.s32.totalorder %s14, 2
      // Predicated region
      $region21: #{tpu_custom_call.1} parent=5 // pred_check
        %p150 = pneg %p149
      $region22: #{tpu_custom_call.1} parent=5 // pred_check_branch
        %152 = sbr.rel (%p150) target = $region24
      $region23: #{tpu_custom_call.1} parent=5 // pred_region
        // Predicated region
        $region25: #{tpu_custom_call.1} parent=23 // pred_check
          %p153 = pneg %p76
        $region26: #{tpu_custom_call.1} parent=23 // pred_check_branch
          %155 = sbr.rel (%p153) target = $region28
        $region27: #{tpu_custom_call.1} parent=23 // pred_region
          %s156 = sand.u32 %s14, 1
          %s157 = scalar_lea.sflag [#allocation3], %s156
          %s158 = sand.u32 %s66, 1
          %s159 = smul.addr %s158, 128
          %s160 = scalar_lea.vmem [#allocation7], %s159
          %s161 = smul.u32 16, %s14
          %163 = vsyncadd %s157, 0
          %s164 = smul.addr %s161, 8
          %s165 = scalar_lea.hbm %s2, %s164
          %s166 = sshll.u32 %s165, 4
          %s167 = int_to_ptr.hbm [resolvable:$true] %s166
          %s168 = sshll.u32 %s160, 4
          %s169 = int_to_ptr.vmem [resolvable:$true] %s168
          %174 = dma.hbm_to_vmem [thread:$0]  %s167, 2048, %s169, %s157, 128, 128, 8
        $region28: #{tpu_custom_call.1} parent=23 // pred_fallthru
          _
      $region24: #{tpu_custom_call.1} parent=5 // pred_fallthru
        _
      %p175 = scmp.le.s32.totalorder 1, %s14
      %p176 = scmp.lt.s32.totalorder %s14, 3
      %p177 = pnand %p175, %p176
      %p178 = pneg %p177
      // Predicated region
      $region29: #{tpu_custom_call.1} parent=5 // pred_check
        _
      $region30: #{tpu_custom_call.1} parent=5 // pred_check_branch
        %180 = sbr.rel (%p177) target = $region32
      $region31: #{tpu_custom_call.1} parent=5 // pred_region
        %s181 = ssub.s32 %s14, 1
        // Predicated region
        $region33: #{tpu_custom_call.1} parent=31 // pred_check
          %p182 = pneg %p35
        $region34: #{tpu_custom_call.1} parent=31 // pred_check_branch
          %184 = sbr.rel (%p182) target = $region36
        $region35: #{tpu_custom_call.1} parent=31 // pred_region
          %186 = dma.done [#allocation3], 1024
        $region36: #{tpu_custom_call.1} parent=31 // pred_fallthru
          _
        // Predicated region
        $region37: #{tpu_custom_call.1} parent=31 // pred_check
          %p187 = pneg %p56
        $region38: #{tpu_custom_call.1} parent=31 // pred_check_branch
          %189 = sbr.rel (%p187) target = $region40
        $region39: #{tpu_custom_call.1} parent=31 // pred_region
          %191 = dma.done [#allocation6], 16
        $region40: #{tpu_custom_call.1} parent=31 // pred_fallthru
          _
        %s192 = sand.u32 %s19, 1
        %s193 = scalar_lea.sflag [#allocation3], %s192
        %s194 = sand.u32 %s69, 1
        %s195 = smul.addr %s194, 128
        %s196 = scalar_lea.vmem [#allocation7], %s195
        // Predicated region
        $region41: #{tpu_custom_call.1} parent=31 // pred_check
          %p197 = pneg %p82
        $region42: #{tpu_custom_call.1} parent=31 // pred_check_branch
          %199 = sbr.rel (%p197) target = $region44
        $region43: #{tpu_custom_call.1} parent=31 // pred_region
          %201 = dma.done %s193, 2048
        $region44: #{tpu_custom_call.1} parent=31 // pred_fallthru
          _
        %p202 = pneg %p35
        %p203 = pneg %p32
        %p204 = pneg %p56
        %p205 = pneg %p53
        %s206 = sand.u32 %s19, 1
        %s207 = scalar_lea.sflag [#allocation3], %s206
        %s208 = sand.u32 %s69, 1
        %s209 = smul.addr %s208, 128
        %s210 = scalar_lea.vmem [#allocation7], %s209
        %p211 = pneg %p82
        %p212 = pneg %p79
        %p213 = pneg %p108
        %p214 = pneg %p105
        %s215 = sand.u32 %s95, 1
        %s216 = scalar_lea.sflag [#allocation4], %s215
        %s217 = sand.u32 %s95, 1
        %s218 = smul.addr %s217, 128
        %s219 = scalar_lea.vmem [#allocation8], %s218
        %s220 = smul.u32 16, %s19
        %s221 = smul.u32 16, %s19
        %v222 = vld [vmem:[%s196] sm:$0xff]
        %v223 = vld [vmem:[%s196 + $0x8] sm:$0xff]
        %v224 = vld [vmem:[%s196 + $0x10] sm:$0xff]
        %v225 = vld [vmem:[%s196 + $0x18] sm:$0xff]
        %v226 = vld [vmem:[%s196 + $0x20] sm:$0xff]
        %v227 = vld [vmem:[%s196 + $0x28] sm:$0xff]
        %v228 = vld [vmem:[%s196 + $0x30] sm:$0xff]
        %v229 = vld [vmem:[%s196 + $0x38] sm:$0xff]
        %v230 = vld [vmem:[%s196 + $0x40] sm:$0xff]
        %v231 = vld [vmem:[%s196 + $0x48] sm:$0xff]
        %v232 = vld [vmem:[%s196 + $0x50] sm:$0xff]
        %v233 = vld [vmem:[%s196 + $0x58] sm:$0xff]
        %v234 = vld [vmem:[%s196 + $0x60] sm:$0xff]
        %v235 = vld [vmem:[%s196 + $0x68] sm:$0xff]
        %v236 = vld [vmem:[%s196 + $0x70] sm:$0xff]
        %v237 = vld [vmem:[%s196 + $0x78] sm:$0xff]
        %v238 = vmul.f32 %v222, -0.5
        %v239 = vmul.f32 %v223, -0.5
        %v240 = vmul.f32 %v224, -0.5
        %v241 = vmul.f32 %v225, -0.5
        %v242 = vmul.f32 %v226, -0.5
        %v243 = vmul.f32 %v227, -0.5
        %v244 = vmul.f32 %v228, -0.5
        %v245 = vmul.f32 %v229, -0.5
        %v246 = vmul.f32 %v230, -0.5
        %v247 = vmul.f32 %v231, -0.5
        %v248 = vmul.f32 %v232, -0.5
        %v249 = vmul.f32 %v233, -0.5
        %v250 = vmul.f32 %v234, -0.5
        %v251 = vmul.f32 %v235, -0.5
        %v252 = vmul.f32 %v236, -0.5
        %v253 = vmul.f32 %v237, -0.5
        %254 = vmax.xlane.f32.xlu0 %v238
        %v255 = vpop.xlane.xlu0 %254
        %256 = vmax.xlane.f32.xlu0 %v239
        %v257 = vpop.xlane.xlu0 %256
        %258 = vmax.xlane.f32.xlu0 %v240
        %v259 = vpop.xlane.xlu0 %258
        %260 = vmax.xlane.f32.xlu0 %v241
        %v261 = vpop.xlane.xlu0 %260
        %262 = vmax.xlane.f32.xlu0 %v242
        %v263 = vpop.xlane.xlu0 %262
        %264 = vmax.xlane.f32.xlu0 %v243
        %v265 = vpop.xlane.xlu0 %264
        %266 = vmax.xlane.f32.xlu0 %v244
        %v267 = vpop.xlane.xlu0 %266
        %268 = vmax.xlane.f32.xlu0 %v245
        %v269 = vpop.xlane.xlu0 %268
        %270 = vmax.xlane.f32.xlu0 %v246
        %v271 = vpop.xlane.xlu0 %270
        %272 = vmax.xlane.f32.xlu0 %v247
        %v273 = vpop.xlane.xlu0 %272
        %274 = vmax.xlane.f32.xlu0 %v248
        %v275 = vpop.xlane.xlu0 %274
        %276 = vmax.xlane.f32.xlu0 %v249
        %v277 = vpop.xlane.xlu0 %276
        %278 = vmax.xlane.f32.xlu0 %v250
        %v279 = vpop.xlane.xlu0 %278
        %280 = vmax.xlane.f32.xlu0 %v251
        %v281 = vpop.xlane.xlu0 %280
        %282 = vmax.xlane.f32.xlu0 %v252
        %v283 = vpop.xlane.xlu0 %282
        %284 = vmax.xlane.f32.xlu0 %v253
        %v285 = vpop.xlane.xlu0 %284
        %v286 = vsub.f32 %v238, %v255
        %v287 = vsub.f32 %v239, %v257
        %v288 = vsub.f32 %v240, %v259
        %v289 = vsub.f32 %v241, %v261
        %v290 = vsub.f32 %v242, %v263
        %v291 = vsub.f32 %v243, %v265
        %v292 = vsub.f32 %v244, %v267
        %v293 = vsub.f32 %v245, %v269
        %v294 = vsub.f32 %v246, %v271
        %v295 = vsub.f32 %v247, %v273
        %v296 = vsub.f32 %v248, %v275
        %v297 = vsub.f32 %v249, %v277
        %v298 = vsub.f32 %v250, %v279
        %v299 = vsub.f32 %v251, %v281
        %v300 = vsub.f32 %v252, %v283
        %v301 = vsub.f32 %v253, %v285
        %v302 = vmul.f32 %v286, 1.442695
        %v303 = vpow.pop %v302
        %v304 = vmul.f32 %v287, 1.442695
        %v305 = vpow.pop %v304
        %v306 = vmul.f32 %v288, 1.442695
        %v307 = vpow.pop %v306
        %v308 = vmul.f32 %v289, 1.442695
        %v309 = vpow.pop %v308
        %v310 = vmul.f32 %v290, 1.442695
        %v311 = vpow.pop %v310
        %v312 = vmul.f32 %v291, 1.442695
        %v313 = vpow.pop %v312
        %v314 = vmul.f32 %v292, 1.442695
        %v315 = vpow.pop %v314
        %v316 = vmul.f32 %v293, 1.442695
        %v317 = vpow.pop %v316
        %v318 = vmul.f32 %v294, 1.442695
        %v319 = vpow.pop %v318
        %v320 = vmul.f32 %v295, 1.442695
        %v321 = vpow.pop %v320
        %v322 = vmul.f32 %v296, 1.442695
        %v323 = vpow.pop %v322
        %v324 = vmul.f32 %v297, 1.442695
        %v325 = vpow.pop %v324
        %v326 = vmul.f32 %v298, 1.442695
        %v327 = vpow.pop %v326
        %v328 = vmul.f32 %v299, 1.442695
        %v329 = vpow.pop %v328
        %v330 = vmul.f32 %v300, 1.442695
        %v331 = vpow.pop %v330
        %v332 = vmul.f32 %v301, 1.442695
        %v333 = vpow.pop %v332
        %334 = vadd.xlane.f32.xlu0 %v303
        %v335 = vpop.xlane.xlu0 %334
        %336 = vadd.xlane.f32.xlu0 %v305
        %v337 = vpop.xlane.xlu0 %336
        %338 = vadd.xlane.f32.xlu0 %v307
        %v339 = vpop.xlane.xlu0 %338
        %340 = vadd.xlane.f32.xlu0 %v309
        %v341 = vpop.xlane.xlu0 %340
        %342 = vadd.xlane.f32.xlu0 %v311
        %v343 = vpop.xlane.xlu0 %342
        %344 = vadd.xlane.f32.xlu0 %v313
        %v345 = vpop.xlane.xlu0 %344
        %346 = vadd.xlane.f32.xlu0 %v315
        %v347 = vpop.xlane.xlu0 %346
        %348 = vadd.xlane.f32.xlu0 %v317
        %v349 = vpop.xlane.xlu0 %348
        %350 = vadd.xlane.f32.xlu0 %v319
        %v351 = vpop.xlane.xlu0 %350
        %352 = vadd.xlane.f32.xlu0 %v321
        %v353 = vpop.xlane.xlu0 %352
        %354 = vadd.xlane.f32.xlu0 %v323
        %v355 = vpop.xlane.xlu0 %354
        %356 = vadd.xlane.f32.xlu0 %v325
        %v357 = vpop.xlane.xlu0 %356
        %358 = vadd.xlane.f32.xlu0 %v327
        %v359 = vpop.xlane.xlu0 %358
        %360 = vadd.xlane.f32.xlu0 %v329
        %v361 = vpop.xlane.xlu0 %360
        %362 = vadd.xlane.f32.xlu0 %v331
        %v363 = vpop.xlane.xlu0 %362
        %364 = vadd.xlane.f32.xlu0 %v333
        %v365 = vpop.xlane.xlu0 %364
        %v366 = vld [vmem:[#allocation2] sm:$0xf]
        %v367 = vld [vmem:[#allocation2 + $0x4] sm:$0xf]
        %v368 = vld [vmem:[#allocation2 + $0x8] sm:$0xf]
        %v369 = vld [vmem:[#allocation2 + $0xc] sm:$0xf]
        %v370 = vld [vmem:[#allocation2 + $0x10] sm:$0xf]
        %v371 = vld [vmem:[#allocation2 + $0x14] sm:$0xf]
        %v372 = vld [vmem:[#allocation2 + $0x18] sm:$0xf]
        %v373 = vld [vmem:[#allocation2 + $0x1c] sm:$0xf]
        %v374 = vld [vmem:[#allocation2 + $0x20] sm:$0xf]
        %v375 = vld [vmem:[#allocation2 + $0x24] sm:$0xf]
        %v376 = vld [vmem:[#allocation2 + $0x28] sm:$0xf]
        %v377 = vld [vmem:[#allocation2 + $0x2c] sm:$0xf]
        %v378 = vld [vmem:[#allocation2 + $0x30] sm:$0xf]
        %v379 = vld [vmem:[#allocation2 + $0x34] sm:$0xf]
        %v380 = vld [vmem:[#allocation2 + $0x38] sm:$0xf]
        %v381 = vld [vmem:[#allocation2 + $0x3c] sm:$0xf]
        %v382 = vpack.c.bf16 %v305, %v303
        %v383 = vpack.c.bf16 %v309, %v307
        %v384 = vpack.c.bf16 %v313, %v311
        %v385 = vpack.c.bf16 %v317, %v315
        %v386 = vpack.c.bf16 %v321, %v319
        %v387 = vpack.c.bf16 %v325, %v323
        %v388 = vpack.c.bf16 %v329, %v327
        %v389 = vpack.c.bf16 %v333, %v331
        %v406 = vunpack.c.l.b16 %v366
        %v407 = vunpack.c.l.b16 %v367
        %v408 = vunpack.c.l.b16 %v368
        %v409 = vunpack.c.l.b16 %v369
        %v410 = vunpack.c.l.b16 %v370
        %v411 = vunpack.c.l.b16 %v371
        %v412 = vunpack.c.l.b16 %v372
        %v413 = vunpack.c.l.b16 %v373
        %v414 = vunpack.c.l.b16 %v374
        %v415 = vunpack.c.l.b16 %v375
        %v416 = vunpack.c.l.b16 %v376
        %v417 = vunpack.c.l.b16 %v377
        %v418 = vunpack.c.l.b16 %v378
        %v419 = vunpack.c.l.b16 %v379
        %v420 = vunpack.c.l.b16 %v380
        %v421 = vunpack.c.l.b16 %v381
        %v422 = vpack.c.b16 %v407, %v406
        %v423 = vpack.c.b16 %v409, %v408
        %v424 = vpack.c.b16 %v411, %v410
        %v425 = vpack.c.b16 %v413, %v412
        %v426 = vpack.c.b16 %v415, %v414
        %v427 = vpack.c.b16 %v417, %v416
        %v428 = vpack.c.b16 %v419, %v418
        %v429 = vpack.c.b16 %v421, %v420
        %438 = vmatpush.bf16.msra.mxu0 %v429
        %439 = vmatpush.bf16.msra.mxu0 %v428
        %440 = vmatpush.bf16.msra.mxu0 %v427
        %441 = vmatpush.bf16.msra.mxu0 %v426
        %442 = vmatpush.bf16.msra.mxu0 %v425
        %443 = vmatpush.bf16.msra.mxu0 %v424
        %444 = vmatpush.bf16.msra.mxu0 %v423
        %445 = vmatpush.bf16.msra.mxu0 %v422
        %446 = vmatmul.bf16.gmra.mxu0 %v382
        %v447 = vpop.f32.mrf.mxu0
        %v448 = vadd.f32 0.0, %v447
        %v449 = vpop.f32.mrf.mxu0
        %v450 = vadd.f32 0.0, %v449
        %451 = vmatmul.bf16.gmra.mxu0 %v383
        %v452 = vpop.f32.mrf.mxu0
        %v453 = vadd.f32 0.0, %v452
        %v454 = vpop.f32.mrf.mxu0
        %v455 = vadd.f32 0.0, %v454
        %456 = vmatmul.bf16.gmra.mxu0 %v384
        %v457 = vpop.f32.mrf.mxu0
        %v458 = vadd.f32 0.0, %v457
        %v459 = vpop.f32.mrf.mxu0
        %v460 = vadd.f32 0.0, %v459
        %461 = vmatmul.bf16.gmra.mxu0 %v385
        %v462 = vpop.f32.mrf.mxu0
        %v463 = vadd.f32 0.0, %v462
        %v464 = vpop.f32.mrf.mxu0
        %v465 = vadd.f32 0.0, %v464
        %466 = vmatmul.bf16.gmra.mxu0 %v386
        %v467 = vpop.f32.mrf.mxu0
        %v468 = vadd.f32 0.0, %v467
        %v469 = vpop.f32.mrf.mxu0
        %v470 = vadd.f32 0.0, %v469
        %471 = vmatmul.bf16.gmra.mxu0 %v387
        %v472 = vpop.f32.mrf.mxu0
        %v473 = vadd.f32 0.0, %v472
        %v474 = vpop.f32.mrf.mxu0
        %v475 = vadd.f32 0.0, %v474
        %476 = vmatmul.bf16.gmra.mxu0 %v388
        %v477 = vpop.f32.mrf.mxu0
        %v478 = vadd.f32 0.0, %v477
        %v479 = vpop.f32.mrf.mxu0
        %v480 = vadd.f32 0.0, %v479
        %481 = vmatmul.bf16.gmra.mxu0 %v389
        %v482 = vpop.f32.mrf.mxu0
        %v483 = vadd.f32 0.0, %v482
        %v484 = vpop.f32.mrf.mxu0
        %v485 = vadd.f32 0.0, %v484
        %486 = vdwg.mxu0
        %v487 = vrcp.pop %v335
        %v488 = vrcp.pop %v337
        %v489 = vrcp.pop %v339
        %v490 = vrcp.pop %v341
        %v491 = vrcp.pop %v343
        %v492 = vrcp.pop %v345
        %v493 = vrcp.pop %v347
        %v494 = vrcp.pop %v349
        %v495 = vrcp.pop %v351
        %v496 = vrcp.pop %v353
        %v497 = vrcp.pop %v355
        %v498 = vrcp.pop %v357
        %v499 = vrcp.pop %v359
        %v500 = vrcp.pop %v361
        %v501 = vrcp.pop %v363
        %v502 = vrcp.pop %v365
        %v503 = vmul.f32 %v448, %v487
        %v504 = vmul.f32 %v450, %v488
        %v505 = vmul.f32 %v453, %v489
        %v506 = vmul.f32 %v455, %v490
        %v507 = vmul.f32 %v458, %v491
        %v508 = vmul.f32 %v460, %v492
        %v509 = vmul.f32 %v463, %v493
        %v510 = vmul.f32 %v465, %v494
        %v511 = vmul.f32 %v468, %v495
        %v512 = vmul.f32 %v470, %v496
        %v513 = vmul.f32 %v473, %v497
        %v514 = vmul.f32 %v475, %v498
        %v515 = vmul.f32 %v478, %v499
        %v516 = vmul.f32 %v480, %v500
        %v517 = vmul.f32 %v483, %v501
        %v518 = vmul.f32 %v485, %v502
        %v519 = vld [vmem:[#allocation5] sm:$0x1]
        %v521 = vperm.slane %v519, 0
        %v523 = vsub.f32 %v503, %v521
        %v524 = vsub.f32 %v504, %v521
        %v525 = vsub.f32 %v505, %v521
        %v526 = vsub.f32 %v506, %v521
        %v527 = vsub.f32 %v507, %v521
        %v528 = vsub.f32 %v508, %v521
        %v529 = vsub.f32 %v509, %v521
        %v530 = vsub.f32 %v510, %v521
        %v531 = vsub.f32 %v511, %v521
        %v532 = vsub.f32 %v512, %v521
        %v533 = vsub.f32 %v513, %v521
        %v534 = vsub.f32 %v514, %v521
        %v535 = vsub.f32 %v515, %v521
        %v536 = vsub.f32 %v516, %v521
        %v537 = vsub.f32 %v517, %v521
        %v538 = vsub.f32 %v518, %v521
        %vm539 = vcmp.ge.f32.partialorder %v523, 0.0
        %vm540 = vcmp.ge.f32.partialorder %v524, 0.0
        %vm541 = vcmp.ge.f32.partialorder %v525, 0.0
        %vm542 = vcmp.ge.f32.partialorder %v526, 0.0
        %vm543 = vcmp.ge.f32.partialorder %v527, 0.0
        %vm544 = vcmp.ge.f32.partialorder %v528, 0.0
        %vm545 = vcmp.ge.f32.partialorder %v529, 0.0
        %vm546 = vcmp.ge.f32.partialorder %v530, 0.0
        %vm547 = vcmp.ge.f32.partialorder %v531, 0.0
        %vm548 = vcmp.ge.f32.partialorder %v532, 0.0
        %vm549 = vcmp.ge.f32.partialorder %v533, 0.0
        %vm550 = vcmp.ge.f32.partialorder %v534, 0.0
        %vm551 = vcmp.ge.f32.partialorder %v535, 0.0
        %vm552 = vcmp.ge.f32.partialorder %v536, 0.0
        %vm553 = vcmp.ge.f32.partialorder %v537, 0.0
        %vm554 = vcmp.ge.f32.partialorder %v538, 0.0
        %v555 = vmul.f32 %v523, 0.01
        %v556 = vmul.f32 %v524, 0.01
        %v557 = vmul.f32 %v525, 0.01
        %v558 = vmul.f32 %v526, 0.01
        %v559 = vmul.f32 %v527, 0.01
        %v560 = vmul.f32 %v528, 0.01
        %v561 = vmul.f32 %v529, 0.01
        %v562 = vmul.f32 %v530, 0.01
        %v563 = vmul.f32 %v531, 0.01
        %v564 = vmul.f32 %v532, 0.01
        %v565 = vmul.f32 %v533, 0.01
        %v566 = vmul.f32 %v534, 0.01
        %v567 = vmul.f32 %v535, 0.01
        %v568 = vmul.f32 %v536, 0.01
        %v569 = vmul.f32 %v537, 0.01
        %v570 = vmul.f32 %v538, 0.01
        %v571 = vsel %vm539, %v523, %v555
        %v572 = vsel %vm540, %v524, %v556
        %v573 = vsel %vm541, %v525, %v557
        %v574 = vsel %vm542, %v526, %v558
        %v575 = vsel %vm543, %v527, %v559
        %v576 = vsel %vm544, %v528, %v560
        %v577 = vsel %vm545, %v529, %v561
        %v578 = vsel %vm546, %v530, %v562
        %v579 = vsel %vm547, %v531, %v563
        %v580 = vsel %vm548, %v532, %v564
        %v581 = vsel %vm549, %v533, %v565
        %v582 = vsel %vm550, %v534, %v566
        %v583 = vsel %vm551, %v535, %v567
        %v584 = vsel %vm552, %v536, %v568
        %v585 = vsel %vm553, %v537, %v569
        %v586 = vsel %vm554, %v538, %v570
        %587 = vst [vmem:[%s219] sm:$0xff] %v571
        %588 = vst [vmem:[%s219 + $0x8] sm:$0xff] %v572
        %589 = vst [vmem:[%s219 + $0x10] sm:$0xff] %v573
        %590 = vst [vmem:[%s219 + $0x18] sm:$0xff] %v574
        %591 = vst [vmem:[%s219 + $0x20] sm:$0xff] %v575
        %592 = vst [vmem:[%s219 + $0x28] sm:$0xff] %v576
        %593 = vst [vmem:[%s219 + $0x30] sm:$0xff] %v577
        %594 = vst [vmem:[%s219 + $0x38] sm:$0xff] %v578
        %595 = vst [vmem:[%s219 + $0x40] sm:$0xff] %v579
        %596 = vst [vmem:[%s219 + $0x48] sm:$0xff] %v580
        %597 = vst [vmem:[%s219 + $0x50] sm:$0xff] %v581
        %598 = vst [vmem:[%s219 + $0x58] sm:$0xff] %v582
        %599 = vst [vmem:[%s219 + $0x60] sm:$0xff] %v583
        %600 = vst [vmem:[%s219 + $0x68] sm:$0xff] %v584
        %601 = vst [vmem:[%s219 + $0x70] sm:$0xff] %v585
        %602 = vst [vmem:[%s219 + $0x78] sm:$0xff] %v586
        %s603 = sand.u32 %s95, 1
        %s604 = scalar_lea.sflag [#allocation4], %s603
        %s605 = sand.u32 %s95, 1
        %s606 = smul.addr %s605, 128
        %s607 = scalar_lea.vmem [#allocation8], %s606
        // Predicated region
        $region45: #{tpu_custom_call.1} parent=31 // pred_check
          %p608 = pneg %p105
        $region46: #{tpu_custom_call.1} parent=31 // pred_check_branch
          %610 = sbr.rel (%p608) target = $region48
        $region47: #{tpu_custom_call.1} parent=31 // pred_region
          %s611 = smul.u32 16, %s19
          %613 = vsyncadd %s604, 0
          %s614 = smul.addr %s611, 8
          %s615 = scalar_lea.hbm %s3, %s614
          %s616 = sshll.u32 %s607, 4
          %s617 = int_to_ptr.vmem [resolvable:$true] %s616
          %s618 = sshll.u32 %s615, 4
          %s619 = int_to_ptr.hbm [resolvable:$true] %s618
          %624 = dma.vmem_to_hbm [thread:$0]  %s617, 2048, %s619, %s604, 128, 128, 8
        $region48: #{tpu_custom_call.1} parent=31 // pred_fallthru
          _
      $region32: #{tpu_custom_call.1} parent=5 // pred_fallthru
        _
      %p625 = scmp.le.s32.totalorder 2, %s14
      // Predicated region
      $region49: #{tpu_custom_call.1} parent=5 // pred_check
        %p626 = pneg %p625
      $region50: #{tpu_custom_call.1} parent=5 // pred_check_branch
        %628 = sbr.rel (%p626) target = $region52
      $region51: #{tpu_custom_call.1} parent=5 // pred_region
        %s629 = ssub.s32 %s14, 2
        // Predicated region
        $region53: #{tpu_custom_call.1} parent=51 // pred_check
          %p630 = pneg %p111
        $region54: #{tpu_custom_call.1} parent=51 // pred_check_branch
          %632 = sbr.rel (%p630) target = $region56
        $region55: #{tpu_custom_call.1} parent=51 // pred_region
          %s633 = sand.u32 %s96, 1
          %s634 = scalar_lea.sflag [#allocation4], %s633
          %s635 = sand.u32 %s96, 1
          %s636 = smul.addr %s635, 128
          %s637 = scalar_lea.vmem [#allocation8], %s636
          %639 = dma.done %s634, 2048
        $region56: #{tpu_custom_call.1} parent=51 // pred_fallthru
          _
      $region52: #{tpu_custom_call.1} parent=5 // pred_fallthru
        _
    $region6: #{tpu_custom_call.1} parent=1 // loop_footer
      %s18 = sadd.s32 1, %s14
    $region7: #{tpu_custom_call.1} parent=1 // loop_footer_branch
      %13 = sbr.rel target = $region3
    $region8: #{tpu_custom_call.1} parent=1 // loop_exit
      _
    %640 = vsyncpa [#allocation3], 1
    %s641 = scalar_lea.sflag [#allocation3], 1
    %642 = vsyncpa %s641, 1
    %643 = vsyncpa [#allocation6], 1
    %644 = vsyncpa [#allocation4], 1
    %s645 = scalar_lea.sflag [#allocation4], 1
    %646 = vsyncpa %s645, 1

</llo_original>
